<compile_context>
chip_gen: v6e
topology: v6e:2x2x1
jax: 0.10.0
libtpu: 0.0.40
codegen_flags: <defaults>
</compile_context>

<pallas_src>
import functools

import jax
import jax.numpy as jnp
from jax.experimental import pallas as pl
from jax.experimental.pallas import tpu as pltpu

_LANE = 128      # lane width
_SUBLANE = 16    # bf16 sublane packing


def _round_up(n, m):
    return ((n + m - 1) // m) * m


def mlp_policy_kernel(x_ref, w1_ref, b1_ref, w2_ref, b2_ref, o_ref):
    # fc1: bf16 MXU operands, f32 accumulation; bias + relu epilogue in f32.
    h = jnp.dot(x_ref[...], w1_ref[...], preferred_element_type=jnp.float32)
    h = jnp.maximum(h + b1_ref[...], 0.0)
    # fc2: downcast activations to bf16 only at the MXU operand (intentional).
    y = jnp.dot(h.astype(jnp.bfloat16), w2_ref[...],
                preferred_element_type=jnp.float32)
    y = y + b2_ref[...]
    # sigmoid: exp -> EUP, approx reciprocal -> EUP (frees VALU slots).
    o_ref[...] = pl.reciprocal(1.0 + jnp.exp(-y), approx=True).astype(o_ref.dtype)


@functools.partial(jax.jit, static_argnames=("block_batch",))
def mlp_policy_forward(state, w1, b1, w2, b2, *, block_batch=512):
    """state: (B, S); w1: (S, H); b1: (1, H); w2: (H, A); b2: (1, A) -> (B, A)."""
    B, S = state.shape
    H = w1.shape[1]
    A = w2.shape[1]

    # Lane-dense output: pad the action dim up to a multiple of 128.
    AP = _round_up(A, _LANE)
    # Batch tile: as large as requested, 16-aligned; pad batch up to a tile multiple.
    TB = min(_round_up(block_batch, _SUBLANE), _round_up(B, _SUBLANE))
    BP = _round_up(B, TB)

    # Pad + cast MXU operands to bf16 (halves weight/activation DMA traffic);
    # biases stay f32 for the f32 epilogue.
    x_p = jnp.pad(state.astype(jnp.bfloat16), ((0, BP - B), (0, 0)))
    w1_b = w1.astype(jnp.bfloat16)
    w2_p = jnp.pad(w2.astype(jnp.bfloat16), ((0, 0), (0, AP - A)))
    b1_f = b1.reshape(1, H).astype(jnp.float32)
    b2_p = jnp.pad(b2.reshape(1, A).astype(jnp.float32), ((0, 0), (0, AP - A)))

    grid = (BP // TB,)
    out = pl.pallas_call(
        mlp_policy_kernel,
        out_shape=jax.ShapeDtypeStruct((BP, AP), jnp.float32),
        grid_spec=pltpu.PrefetchScalarGridSpec(
            num_scalar_prefetch=0,
            grid=grid,
            in_specs=[
                pl.BlockSpec((TB, S), lambda i: (i, 0)),   # state tile (marches over batch)
                pl.BlockSpec((S, H), lambda i: (0, 0)),    # W1: VMEM-resident across tiles
                pl.BlockSpec((1, H), lambda i: (0, 0)),    # b1: resident
                pl.BlockSpec((H, AP), lambda i: (0, 0)),   # W2 (lane-padded): resident
                pl.BlockSpec((1, AP), lambda i: (0, 0)),   # b2 (lane-padded): resident
            ],
            out_specs=pl.BlockSpec((TB, AP), lambda i: (i, 0)),
        ),
        compiler_params=pltpu.CompilerParams(
            dimension_semantics=("parallel",),   # shard batch tiles across TCs (v7x)
        ),
    )(x_p, w1_b, b1_f, w2_p, b2_p)

    return out[:B, :A]


def init_mlp_policy_params(key, state_size, action_size, hidden=128,
                           dtype=jnp.float32):
    """Deterministic init mimicking PyTorch nn.Linear default U[-1/sqrt(in), 1/sqrt(in)]."""
    k1, k2, k3, k4 = jax.random.split(key, 4)
    bound1 = 1.0 / jnp.sqrt(jnp.array(state_size, dtype))
    bound2 = 1.0 / jnp.sqrt(jnp.array(hidden, dtype))
    # stored as [in, out] so the kernel computes x @ W directly
    w1 = jax.random.uniform(k1, (state_size, hidden), dtype, -bound1, bound1)
    b1 = jax.random.uniform(k2, (1, hidden), dtype, -bound1, bound1)
    w2 = jax.random.uniform(k3, (hidden, action_size), dtype, -bound2, bound2)
    b2 = jax.random.uniform(k4, (1, action_size), dtype, -bound2, bound2)
    return w1, b1, w2, b2


def reference_forward(state, w1, b1, w2, b2):
    h = jnp.maximum(state @ w1 + b1, 0.0)
    return jax.nn.sigmoid(h @ w2 + b2)


if __name__ == "__main__":
    batch = 2
    state_size = 32
    action_size = 8

    key = jax.random.PRNGKey(0)
    k_state, k_params = jax.random.split(key)

    state = jax.random.normal(k_state, (batch, state_size), jnp.float32)
    w1, b1, w2, b2 = init_mlp_policy_params(k_params, state_size, action_size)

    # tiny-batch path (single padded tile)
    out = jax.block_until_ready(mlp_policy_forward(state, w1, b1, w2, b2))
    ref = reference_forward(state, w1, b1, w2, b2)
    assert out.shape == (batch, action_size)
    # bf16 MXU operands + approx reciprocal -> relaxed tolerance vs f32 reference
    assert jnp.allclose(out, ref, atol=2e-2, rtol=2e-2), float(jnp.max(jnp.abs(out - ref)))

    # exercise the batch-tiled grid path (ragged batch, multiple grid steps)
    big_state = jax.random.normal(k_state, (37, state_size), jnp.float32)
    out2 = jax.block_until_ready(
        mlp_policy_forward(big_state, w1, b1, w2, b2, block_batch=16))
    ref2 = reference_forward(big_state, w1, b1, w2, b2)
    assert out2.shape == (37, action_size)
    assert jnp.allclose(out2, ref2, atol=2e-2, rtol=2e-2)

    print("KERNEL_OK")
</pallas_src>

<mosaic_0001>
module attributes {stable_mosaic.version = 11 : i64} {
  func.func @mlp_policy_kernel(%arg0: i32, %arg1: memref<16x32xbf16, #tpu.memory_space<vmem>>, %arg2: memref<32x128xbf16, #tpu.memory_space<vmem>>, %arg3: memref<1x128xf32, #tpu.memory_space<vmem>>, %arg4: memref<128x128xbf16, #tpu.memory_space<vmem>>, %arg5: memref<1x128xf32, #tpu.memory_space<vmem>>, %arg6: memref<16x128xf32, #tpu.memory_space<vmem>>) attributes {dimension_semantics = [#tpu.dimension_semantics<parallel>], iteration_bounds = array<i64: 1>, scalar_prefetch = 0 : i64, scratch_operands = 0 : i64, tpu.core_type = #tpu.core_type<tc>, window_params = [{transform_indices = @transform_0, window_bounds = array<i64: 16, 32>}, {pipeline_mode = #tpu.pipeline_mode<synchronous>, transform_indices = @transform_1, window_bounds = array<i64: 32, 128>}, {pipeline_mode = #tpu.pipeline_mode<synchronous>, transform_indices = @transform_2, window_bounds = array<i64: 1, 128>}, {pipeline_mode = #tpu.pipeline_mode<synchronous>, transform_indices = @transform_3, window_bounds = array<i64: 128, 128>}, {pipeline_mode = #tpu.pipeline_mode<synchronous>, transform_indices = @transform_4, window_bounds = array<i64: 1, 128>}, {transform_indices = @transform_5, window_bounds = array<i64: 16, 128>}]} {
    %c0 = arith.constant 0 : index
    %c0_0 = arith.constant 0 : index
    %0 = vector.load %arg1[%c0, %c0_0] : memref<16x32xbf16, #tpu.memory_space<vmem>>, vector<16x32xbf16>
    %c0_1 = arith.constant 0 : index
    %c0_2 = arith.constant 0 : index
    %1 = vector.load %arg2[%c0_1, %c0_2] : memref<32x128xbf16, #tpu.memory_space<vmem>>, vector<32x128xbf16>
    %cst = arith.constant dense<0.000000e+00> : vector<16x128xf32>
    %2 = tpu.matmul %0, %1, %cst {dimension_numbers = #tpu.dot_dimension_numbers<[1], [0], [0], [1], [0, 0, 1, 1], [], []>} : vector<16x32xbf16>, vector<32x128xbf16>, vector<16x128xf32> -> vector<16x128xf32>
    %c0_3 = arith.constant 0 : index
    %c0_4 = arith.constant 0 : index
    %3 = vector.load %arg3[%c0_3, %c0_4] : memref<1x128xf32, #tpu.memory_space<vmem>>, vector<1x128xf32>
    %4 = vector.broadcast %3 : vector<1x128xf32> to vector<16x128xf32>
    %5 = arith.addf %2, %4 : vector<16x128xf32>
    %cst_5 = arith.constant 0.000000e+00 : f32
    %6 = vector.broadcast %cst_5 : f32 to vector<16x128xf32>
    %7 = arith.maximumf %5, %6 : vector<16x128xf32>
    %8 = arith.truncf %7 : vector<16x128xf32> to vector<16x128xbf16>
    %c0_6 = arith.constant 0 : index
    %c0_7 = arith.constant 0 : index
    %9 = vector.load %arg4[%c0_6, %c0_7] : memref<128x128xbf16, #tpu.memory_space<vmem>>, vector<128x128xbf16>
    %cst_8 = arith.constant dense<0.000000e+00> : vector<16x128xf32>
    %10 = tpu.matmul %8, %9, %cst_8 {dimension_numbers = #tpu.dot_dimension_numbers<[1], [0], [0], [1], [0, 0, 1, 1], [], []>} : vector<16x128xbf16>, vector<128x128xbf16>, vector<16x128xf32> -> vector<16x128xf32>
    %c0_9 = arith.constant 0 : index
    %c0_10 = arith.constant 0 : index
    %11 = vector.load %arg5[%c0_9, %c0_10] : memref<1x128xf32, #tpu.memory_space<vmem>>, vector<1x128xf32>
    %12 = vector.broadcast %11 : vector<1x128xf32> to vector<16x128xf32>
    %13 = arith.addf %10, %12 : vector<16x128xf32>
    %cst_11 = arith.constant 0.000000e+00 : f32
    %14 = vector.broadcast %cst_11 : f32 to vector<16x128xf32>
    %15 = arith.subf %14, %13 : vector<16x128xf32>
    %16 = math.exp %15 : vector<16x128xf32>
    %cst_12 = arith.constant 1.000000e+00 : f32
    %17 = vector.broadcast %cst_12 : f32 to vector<16x128xf32>
    %18 = arith.addf %17, %16 : vector<16x128xf32>
    %19 = tpu.reciprocal %18 {approx = true} : vector<16x128xf32> -> vector<16x128xf32>
    %c0_13 = arith.constant 0 : index
    %c0_14 = arith.constant 0 : index
    %20 = vector.load %arg6[%c0_13, %c0_14] : memref<16x128xf32, #tpu.memory_space<vmem>>, vector<16x128xf32>
    tpu.vector_store %arg6[%c0_13, %c0_14], %19 {strides = array<i32>} : memref<16x128xf32, #tpu.memory_space<vmem>>, vector<16x128xf32>,
    return
  }
  func.func @transform_0(%arg0: i32) -> (i32, i32) {
    %c0_i32 = arith.constant 0 : i32
    %c0_i32_0 = arith.constant 0 : i32
    return %arg0, %c0_i32 : i32, i32
  }
  func.func @transform_1(%arg0: i32) -> (i32, i32) {
    %c0_i32 = arith.constant 0 : i32
    %c0_i32_0 = arith.constant 0 : i32
    %c0_i32_1 = arith.constant 0 : i32
    return %c0_i32, %c0_i32_0 : i32, i32
  }
  func.func @transform_2(%arg0: i32) -> (i32, i32) {
    %c0_i32 = arith.constant 0 : i32
    %c0_i32_0 = arith.constant 0 : i32
    %c0_i32_1 = arith.constant 0 : i32
    return %c0_i32, %c0_i32_0 : i32, i32
  }
  func.func @transform_3(%arg0: i32) -> (i32, i32) {
    %c0_i32 = arith.constant 0 : i32
    %c0_i32_0 = arith.constant 0 : i32
    %c0_i32_1 = arith.constant 0 : i32
    return %c0_i32, %c0_i32_0 : i32, i32
  }
  func.func @transform_4(%arg0: i32) -> (i32, i32) {
    %c0_i32 = arith.constant 0 : i32
    %c0_i32_0 = arith.constant 0 : i32
    %c0_i32_1 = arith.constant 0 : i32
    return %c0_i32, %c0_i32_0 : i32, i32
  }
  func.func @transform_5(%arg0: i32) -> (i32, i32) {
    %c0_i32 = arith.constant 0 : i32
    %c0_i32_0 = arith.constant 0 : i32
    return %arg0, %c0_i32 : i32, i32
  }
}

</mosaic_0001>

<llo_original>
// kernel: mlp_policy_forward.1
$region0: #{mlp_policy_forward.1}
  #allocation0 [shape = 'u32[]', space=smem, size = 0x4, offset = 0x4, fixed_abs, tag = 'smem constant byte address 0x4 - core index']
  #allocation1 [shape = 'u32[144,128]{1,0:T(1,128)}', space=vmem, size = 0x12000, scoped, tag = 'internal scratch']
  %s0 = inlined_call_operand.vmem [shape: bf16[16,32], index: 0, kind: input, shape index: {}]
  %s1 = inlined_call_operand.vmem [shape: bf16[32,128], index: 1, kind: input, shape index: {}]
  %s2 = inlined_call_operand.vmem [shape: f32[1,128], index: 2, kind: input, shape index: {}]
  %s3 = inlined_call_operand.vmem [shape: bf16[128,128], index: 3, kind: input, shape index: {}]
  %s4 = inlined_call_operand.vmem [shape: f32[1,128], index: 4, kind: input, shape index: {}]
  %s5 = inlined_call_operand.vmem [shape: f32[16,128], index: 5, kind: output, shape index: {}]
  %s6 = sld [smem:[#allocation0]]
  $region30: #{mlp_policy_forward.1} parent=0
    _
  %s8 = ssub.s32 1, %s6
  %s9 = scalar_select 0, %s8, %s6
  // Predicated region
  $region2: #{mlp_policy_forward.1} parent=0 // pred_check
    _
  $region3: #{mlp_policy_forward.1} parent=0 // pred_check_branch
    %11 = sbr.rel (0) target = $region5
  $region4: #{mlp_policy_forward.1} parent=0 // pred_region
    _
  $region5: #{mlp_policy_forward.1} parent=0 // pred_fallthru
    _
  // Predicated region
  $region6: #{mlp_policy_forward.1} parent=0 // pred_check
    _
  $region7: #{mlp_policy_forward.1} parent=0 // pred_check_branch
    %13 = sbr.rel (0) target = $region9
  $region8: #{mlp_policy_forward.1} parent=0 // pred_region
    _
  $region9: #{mlp_policy_forward.1} parent=0 // pred_fallthru
    _
  // Predicated region
  $region10: #{mlp_policy_forward.1} parent=0 // pred_check
    _
  $region11: #{mlp_policy_forward.1} parent=0 // pred_check_branch
    %15 = sbr.rel (0) target = $region13
  $region12: #{mlp_policy_forward.1} parent=0 // pred_region
    _
  $region13: #{mlp_policy_forward.1} parent=0 // pred_fallthru
    _
  // Predicated region
  $region14: #{mlp_policy_forward.1} parent=0 // pred_check
    _
  $region15: #{mlp_policy_forward.1} parent=0 // pred_check_branch
    %17 = sbr.rel (0) target = $region17
  $region16: #{mlp_policy_forward.1} parent=0 // pred_region
    _
  $region17: #{mlp_policy_forward.1} parent=0 // pred_fallthru
    _
  // Predicated region
  $region18: #{mlp_policy_forward.1} parent=0 // pred_check
    _
  $region19: #{mlp_policy_forward.1} parent=0 // pred_check_branch
    %19 = sbr.rel (0) target = $region21
  $region20: #{mlp_policy_forward.1} parent=0 // pred_region
    _
  $region21: #{mlp_policy_forward.1} parent=0 // pred_fallthru
    _
  %v21 = vld [vmem:[%s0] sm:$0xf]
  %v22 = vld [vmem:[%s0 + $0x4] sm:$0xf]
  %v23 = vld [vmem:[%s1] sm:$0xf]
  %v24 = vld [vmem:[%s1 + $0x4] sm:$0xf]
  %v25 = vld [vmem:[%s1 + $0x8] sm:$0xf]
  %v26 = vld [vmem:[%s1 + $0xc] sm:$0xf]
  %v27 = vld [vmem:[%s2] sm:$0x1]
  %v29 = vlaneseq
  %v30 = vshrl.u32 %v29, 7
  %v31 = vsub.s32 0, %v30
  %v32 = vrot.slane %v27, %v31
  %v36 = vunpack.c.l.b16 %v21
  %v37 = vunpack.c.l.b16 %v22
  %v38 = vpack.c.b16 %v37, %v36
  %v43 = vunpack.c.l.b16 %v23
  %v44 = vunpack.c.l.b16 %v24
  %v45 = vunpack.c.l.b16 %v25
  %v46 = vunpack.c.l.b16 %v26
  %v47 = vpack.c.b16 %v44, %v43
  %v48 = vpack.c.b16 %v46, %v45
  %vm51 = vcmask 261120
  %v53 = vsel %vm51, %v38, 0
  %55 = vmatprep.subr.bf16.mxu0 0
  %56 = vmatpush1.bf16.msra.mxu0 0
  %57 = vmatprep.subr.bf16.mxu0 0
  %58 = vmatpush1.bf16.msra.mxu0 0
  %59 = vmatprep.subr.bf16.mxu0 0
  %60 = vmatpush1.bf16.msra.mxu0 0
  %61 = vmatprep.subr.bf16.mxu0 0
  %62 = vmatpush1.bf16.msra.mxu0 0
  %63 = vmatprep.subr.bf16.mxu0 0
  %64 = vmatpush1.bf16.msra.mxu0 0
  %65 = vmatprep.subr.bf16.mxu0 0
  %66 = vmatpush1.bf16.msra.mxu0 0
  %67 = vmatprep.subr.bf16.mxu0 0
  %68 = vmatpush1.bf16.msra.mxu0 %v48
  %69 = vmatprep.subr.bf16.mxu0 0
  %70 = vmatpush1.bf16.msra.mxu0 %v47
  %71 = vmatprep.subr.bf16.mxu0 0
  %72 = vmatpush2.bf16.msra.mxu0 0
  %73 = vmatprep.subr.bf16.mxu0 0
  %74 = vmatpush2.bf16.msra.mxu0 0
  %75 = vmatprep.subr.bf16.mxu0 0
  %76 = vmatpush2.bf16.msra.mxu0 0
  %77 = vmatprep.subr.bf16.mxu0 0
  %78 = vmatpush2.bf16.msra.mxu0 0
  %79 = vmatprep.subr.bf16.mxu0 0
  %80 = vmatpush2.bf16.msra.mxu0 0
  %81 = vmatprep.subr.bf16.mxu0 0
  %82 = vmatpush2.bf16.msra.mxu0 0
  %83 = vmatprep.subr.bf16.mxu0 0
  %84 = vmatpush2.bf16.msra.mxu0 0
  %85 = vmatprep.subr.bf16.mxu0 0
  %86 = vmatpush2.bf16.msra.mxu0 0
  %87 = vmatprep.mubr.bf16.mxu0 0
  %88 = vmatmul.mubr.bf16.gmra.mxu0 %v53
  %v89 = vpop.f32.mrf.mxu0
  %v90 = vadd.f32 %v32, %v89
  %v91 = vpop.f32.mrf.mxu0
  %v92 = vpop.f32.mrf.mxu0
  %v93 = vadd.f32 %v32, %v92
  %v94 = vpop.f32.mrf.mxu0
  %95 = vdwg.mxu0
  %v96 = vmax.f32 %v90, 0.0
  %v97 = vmax.f32 %v93, 0.0
  %v98 = vpack.c.bf16 %v97, %v96
  %v99 = vld [vmem:[%s3] sm:$0xf]
  %v100 = vld [vmem:[%s3 + $0x4] sm:$0xf]
  %v101 = vld [vmem:[%s3 + $0x8] sm:$0xf]
  %v102 = vld [vmem:[%s3 + $0xc] sm:$0xf]
  %v103 = vld [vmem:[%s3 + $0x10] sm:$0xf]
  %v104 = vld [vmem:[%s3 + $0x14] sm:$0xf]
  %v105 = vld [vmem:[%s3 + $0x18] sm:$0xf]
  %v106 = vld [vmem:[%s3 + $0x1c] sm:$0xf]
  %v107 = vld [vmem:[%s3 + $0x20] sm:$0xf]
  %v108 = vld [vmem:[%s3 + $0x24] sm:$0xf]
  %v109 = vld [vmem:[%s3 + $0x28] sm:$0xf]
  %v110 = vld [vmem:[%s3 + $0x2c] sm:$0xf]
  %v111 = vld [vmem:[%s3 + $0x30] sm:$0xf]
  %v112 = vld [vmem:[%s3 + $0x34] sm:$0xf]
  %v113 = vld [vmem:[%s3 + $0x38] sm:$0xf]
  %v114 = vld [vmem:[%s3 + $0x3c] sm:$0xf]
  %v115 = vld [vmem:[%s4] sm:$0x1]
  %v117 = vlaneseq
  %v118 = vshrl.u32 %v117, 7
  %v119 = vsub.s32 0, %v118
  %v120 = vrot.slane %v115, %v119
  %v138 = vunpack.c.l.b16 %v99
  %v139 = vunpack.c.l.b16 %v100
  %v140 = vunpack.c.l.b16 %v101
  %v141 = vunpack.c.l.b16 %v102
  %v142 = vunpack.c.l.b16 %v103
  %v143 = vunpack.c.l.b16 %v104
  %v144 = vunpack.c.l.b16 %v105
  %v145 = vunpack.c.l.b16 %v106
  %v146 = vunpack.c.l.b16 %v107
  %v147 = vunpack.c.l.b16 %v108
  %v148 = vunpack.c.l.b16 %v109
  %v149 = vunpack.c.l.b16 %v110
  %v150 = vunpack.c.l.b16 %v111
  %v151 = vunpack.c.l.b16 %v112
  %v152 = vunpack.c.l.b16 %v113
  %v153 = vunpack.c.l.b16 %v114
  %v154 = vpack.c.b16 %v139, %v138
  %v155 = vpack.c.b16 %v141, %v140
  %v156 = vpack.c.b16 %v143, %v142
  %v157 = vpack.c.b16 %v145, %v144
  %v158 = vpack.c.b16 %v147, %v146
  %v159 = vpack.c.b16 %v149, %v148
  %v160 = vpack.c.b16 %v151, %v150
  %v161 = vpack.c.b16 %v153, %v152
  %170 = vmatprep.subr.bf16.mxu0 0
  %171 = vmatpush1.bf16.msra.mxu0 %v161
  %172 = vmatprep.subr.bf16.mxu0 0
  %173 = vmatpush1.bf16.msra.mxu0 %v160
  %174 = vmatprep.subr.bf16.mxu0 0
  %175 = vmatpush1.bf16.msra.mxu0 %v159
  %176 = vmatprep.subr.bf16.mxu0 0
  %177 = vmatpush1.bf16.msra.mxu0 %v158
  %178 = vmatprep.subr.bf16.mxu0 0
  %179 = vmatpush1.bf16.msra.mxu0 %v157
  %180 = vmatprep.subr.bf16.mxu0 0
  %181 = vmatpush1.bf16.msra.mxu0 %v156
  %182 = vmatprep.subr.bf16.mxu0 0
  %183 = vmatpush1.bf16.msra.mxu0 %v155
  %184 = vmatprep.subr.bf16.mxu0 0
  %185 = vmatpush1.bf16.msra.mxu0 %v154
  %186 = vmatprep.subr.bf16.mxu0 0
  %187 = vmatpush2.bf16.msra.mxu0 0
  %188 = vmatprep.subr.bf16.mxu0 0
  %189 = vmatpush2.bf16.msra.mxu0 0
  %190 = vmatprep.subr.bf16.mxu0 0
  %191 = vmatpush2.bf16.msra.mxu0 0
  %192 = vmatprep.subr.bf16.mxu0 0
  %193 = vmatpush2.bf16.msra.mxu0 0
  %194 = vmatprep.subr.bf16.mxu0 0
  %195 = vmatpush2.bf16.msra.mxu0 0
  %196 = vmatprep.subr.bf16.mxu0 0
  %197 = vmatpush2.bf16.msra.mxu0 0
  %198 = vmatprep.subr.bf16.mxu0 0
  %199 = vmatpush2.bf16.msra.mxu0 0
  %200 = vmatprep.subr.bf16.mxu0 0
  %201 = vmatpush2.bf16.msra.mxu0 0
  %202 = vmatprep.mubr.bf16.mxu0 0
  %203 = vmatmul.mubr.bf16.gmra.mxu0 %v98
  %v204 = vpop.f32.mrf.mxu0
  %v205 = vadd.f32 %v120, %v204
  %v206 = vpop.f32.mrf.mxu0
  %v207 = vpop.f32.mrf.mxu0
  %v208 = vadd.f32 %v120, %v207
  %v209 = vpop.f32.mrf.mxu0
  %210 = vdwg.mxu0
  %v211 = vsub.f32 0.0, %v205
  %v212 = vsub.f32 0.0, %v208
  %v213 = vmul.f32 %v211, 1.442695
  %v214 = vpow.pop %v213
  %v215 = vmul.f32 %v212, 1.442695
  %v216 = vpow.pop %v215
  %v217 = vadd.f32 %v214, 1.0
  %v218 = vadd.f32 %v216, 1.0
  %v219 = vrcp.pop %v217
  %v220 = vrcp.pop %v218
  %221 = vst [vmem:[%s5] sm:$0xff] %v219
  %222 = vst [vmem:[%s5 + $0x8] sm:$0xff] %v220
  // Predicated region
  $region22: #{mlp_policy_forward.1} parent=0 // pred_check
    _
  $region23: #{mlp_policy_forward.1} parent=0 // pred_check_branch
    %224 = sbr.rel (0) target = $region25
  $region24: #{mlp_policy_forward.1} parent=0 // pred_region
    _
  $region25: #{mlp_policy_forward.1} parent=0 // pred_fallthru
    _
  // Predicated region
  $region26: #{mlp_policy_forward.1} parent=0 // pred_check
    _
  $region27: #{mlp_policy_forward.1} parent=0 // pred_check_branch
    %226 = sbr.rel (0) target = $region29
  $region28: #{mlp_policy_forward.1} parent=0 // pred_region
    _
  $region29: #{mlp_policy_forward.1} parent=0 // pred_fallthru
    _

</llo_original>
